<compile_context>
chip_gen: v7x
topology: tpu7x:2x2x1
jax: 0.10.0
libtpu: 0.0.40
codegen_flags: <defaults>
</compile_context>

<pallas_src>
import numpy as np
import jax
import jax.numpy as jnp
from jax.experimental import pallas as pl
from jax.experimental.pallas import tpu as pltpu


def _ccl_matmul_kernel(w_ref, b_ref, p_ref, o_ref):
    # w_ref : (c_out, K)     VMEM   (K = c_in*kh*kw, tap-major / ci-minor ordering)
    # b_ref : (c_out, 1)     VMEM
    # p_ref : (1, K, N)      VMEM   (this batch's stride-folded im2col slab, N = Ho*Wo)
    # o_ref : (1, c_out, N)  VMEM   (lane-dense output slab)
    acc = jnp.dot(w_ref[...], p_ref[0, :, :],
                  preferred_element_type=jnp.float32)      # MXU: (c_out, N)
    o_ref[0, :, :] = acc + b_ref[...]                       # (c_out,1) broadcasts over lanes


def ccl_forward(x, weight, bias, stride):
    B, c_in, H, W = x.shape
    c_out, _, kh, kw = weight.shape
    s0, s1 = int(stride[0]), int(stride[1])
    Ho = -(-H // s0)          # == len(range(0, H, s0)), matches torch's [::s0]
    Wo = -(-W // s1)
    N = Ho * Wo
    K = c_in * kh * kw

    # ---- stride-folded im2col (wrapper-side data rearrangement only, no FLOPs) ----
    # patches[b, (u*kw+v)*c_in + ci, io*Wo + jo] = x[b, ci, (io*s0 - u) % H, (jo*s1 - v) % W]
    # TODO(synk): torch.fft.rfft2/irfft2 have no Pallas primitive; replaced by the
    # mathematically identical circular convolution.  Tap extraction stays in the
    # wrapper because in-kernel lane-merging reshapes / cross-tile minor-dim slices
    # are not reliably lowered by Mosaic; all arithmetic runs inside the kernel.
    cols = []
    for u in range(kh):
        for v in range(kw):
            cols.append(jnp.roll(x, shift=(u, v), axis=(2, 3))[:, :, ::s0, ::s1])
    patches = jnp.stack(cols, axis=1).reshape(B, K, N).astype(jnp.float32)

    # Weight reordered to match the (tap-major, ci-minor) K ordering of `patches`.
    w2 = jnp.transpose(weight, (0, 2, 3, 1)).reshape(c_out, K).astype(jnp.float32)
    b2 = bias.reshape(c_out, 1).astype(jnp.float32)

    out = pl.pallas_call(
        _ccl_matmul_kernel,
        out_shape=jax.ShapeDtypeStruct((B, c_out, N), jnp.float32),
        grid=(B,),
        in_specs=[
            pl.BlockSpec((c_out, K), lambda b: (0, 0)),   # weights resident in VMEM
            pl.BlockSpec((c_out, 1), lambda b: (0, 0)),   # bias resident in VMEM
            pl.BlockSpec((1, K, N), lambda b: (b, 0, 0)),  # one batch's im2col per step
        ],
        out_specs=pl.BlockSpec((1, c_out, N), lambda b: (b, 0, 0)),
        compiler_params=pltpu.CompilerParams(
            dimension_semantics=("parallel",)),            # >=2 steps -> both v7x TCs busy
    )(w2, b2, patches)

    return out.reshape(B, c_out, Ho, Wo)


def _reference_numpy(x, w, b, stride):
    # Mirrors the PyTorch forward exactly (FFT route), in numpy / float64.
    H, W = x.shape[-2:]
    xf = np.fft.rfft2(x)[:, None]                 # (B, 1, C_in, H, Wf)
    wf = np.fft.rfft2(w, s=(H, W))[None]          # (1, C_out, C_in, H, Wf)
    h = (xf * wf).sum(2)                          # (B, C_out, H, Wf)
    h = np.fft.irfft2(h, s=(H, W)) + b.reshape(-1, 1, 1)
    return h[:, :, ::stride[0], ::stride[1]]


if __name__ == "__main__":
    B, c_in, c_out, H, W = 2, 4, 8, 16, 16
    kh = kw = 3
    stride = (2, 2)

    key = jax.random.PRNGKey(0)
    k1, k2, k3 = jax.random.split(key, 3)
    Kinit = float(np.sqrt(1.0 / (c_in * kh * kw)))
    weight = (2.0 * jax.random.uniform(k1, (c_out, c_in, kh, kw), jnp.float32) - 1.0) * Kinit
    bias = (2.0 * jax.random.uniform(k2, (c_out,), jnp.float32) - 1.0) * Kinit
    x = jax.random.normal(k3, (B, c_in, H, W), dtype=jnp.float32)

    y = ccl_forward(x, weight, bias, stride)
    y = jax.block_until_ready(y)

    ref = _reference_numpy(np.asarray(x, np.float64),
                           np.asarray(weight, np.float64),
                           np.asarray(bias, np.float64),
                           stride)
    assert y.shape == ref.shape, (y.shape, ref.shape)
    np.testing.assert_allclose(np.asarray(y, np.float64), ref, rtol=1e-4, atol=1e-4)

    print("KERNEL_OK")
</pallas_src>

<mosaic_0001>
module attributes {stable_mosaic.version = 11 : i64} {
  func.func @_ccl_matmul_kernel(%arg0: i32, %arg1: memref<8x36xf32, #tpu.memory_space<vmem>>, %arg2: memref<8x1xf32, #tpu.memory_space<vmem>>, %arg3: memref<1x36x64xf32, #tpu.memory_space<vmem>>, %arg4: memref<1x8x64xf32, #tpu.memory_space<vmem>>) attributes {dimension_semantics = [#tpu.dimension_semantics<parallel>], iteration_bounds = array<i64: 2>, scalar_prefetch = 0 : i64, scratch_operands = 0 : i64, tpu.core_type = #tpu.core_type<tc>, window_params = [{pipeline_mode = #tpu.pipeline_mode<synchronous>, transform_indices = @transform_0, window_bounds = array<i64: 8, 36>}, {pipeline_mode = #tpu.pipeline_mode<synchronous>, transform_indices = @transform_1, window_bounds = array<i64: 8, 1>}, {transform_indices = @transform_2, window_bounds = array<i64: 1, 36, 64>}, {transform_indices = @transform_3, window_bounds = array<i64: 1, 8, 64>}]} {
    %c0 = arith.constant 0 : index
    %c0_0 = arith.constant 0 : index
    %0 = vector.load %arg1[%c0, %c0_0] : memref<8x36xf32, #tpu.memory_space<vmem>>, vector<8x36xf32>
    %c0_1 = arith.constant 0 : index
    %c0_2 = arith.constant 0 : index
    %c0_3 = arith.constant 0 : index
    %1 = vector.load %arg3[%c0_1, %c0_2, %c0_3] : memref<1x36x64xf32, #tpu.memory_space<vmem>>, vector<1x36x64xf32>
    %2 = vector.shape_cast %1 : vector<1x36x64xf32> to vector<36x64xf32>
    %cst = arith.constant dense<0.000000e+00> : vector<8x64xf32>
    %3 = tpu.matmul %0, %2, %cst {dimension_numbers = #tpu.dot_dimension_numbers<[1], [0], [0], [1], [0, 0, 1, 1], [], []>} : vector<8x36xf32>, vector<36x64xf32>, vector<8x64xf32> -> vector<8x64xf32>
    %c0_4 = arith.constant 0 : index
    %c0_5 = arith.constant 0 : index
    %4 = vector.load %arg2[%c0_4, %c0_5] : memref<8x1xf32, #tpu.memory_space<vmem>>, vector<8x1xf32>
    %5 = vector.broadcast %4 : vector<8x1xf32> to vector<8x64xf32>
    %6 = arith.addf %3, %5 : vector<8x64xf32>
    %c0_6 = arith.constant 0 : index
    %c0_7 = arith.constant 0 : index
    %c0_8 = arith.constant 0 : index
    %7 = vector.load %arg4[%c0_6, %c0_7, %c0_8] : memref<1x8x64xf32, #tpu.memory_space<vmem>>, vector<1x8x64xf32>
    %8 = vector.shape_cast %7 : vector<1x8x64xf32> to vector<8x64xf32>
    %9 = vector.shape_cast %6 : vector<8x64xf32> to vector<1x8x64xf32>
    tpu.vector_store %arg4[%c0_6, %c0_7, %c0_8], %9 {strides = array<i32>} : memref<1x8x64xf32, #tpu.memory_space<vmem>>, vector<1x8x64xf32>,
    return
  }
  func.func @transform_0(%arg0: i32) -> (i32, i32) {
    %c0_i32 = arith.constant 0 : i32
    %c0_i32_0 = arith.constant 0 : i32
    %c0_i32_1 = arith.constant 0 : i32
    return %c0_i32, %c0_i32_0 : i32, i32
  }
  func.func @transform_1(%arg0: i32) -> (i32, i32) {
    %c0_i32 = arith.constant 0 : i32
    %c0_i32_0 = arith.constant 0 : i32
    %c0_i32_1 = arith.constant 0 : i32
    return %c0_i32, %c0_i32_0 : i32, i32
  }
  func.func @transform_2(%arg0: i32) -> (i32, i32, i32) {
    %c0_i32 = arith.constant 0 : i32
    %c0_i32_0 = arith.constant 0 : i32
    %c0_i32_1 = arith.constant 0 : i32
    return %arg0, %c0_i32, %c0_i32_0 : i32, i32, i32
  }
  func.func @transform_3(%arg0: i32) -> (i32, i32, i32) {
    %c0_i32 = arith.constant 0 : i32
    %c0_i32_0 = arith.constant 0 : i32
    %c0_i32_1 = arith.constant 0 : i32
    return %arg0, %c0_i32, %c0_i32_0 : i32, i32, i32
  }
}

</mosaic_0001>

<llo_original>
// kernel: tpu_custom_call.1
$region0: #{tpu_custom_call.1}
  #allocation0 [shape = 'u32[]', space=smem, size = 0x4, offset = 0x4, fixed_abs, tag = 'smem constant byte address 0x4 - core index']
  #allocation1 [shape = 'u32[144,128]{1,0:T(1,128)}', space=vmem, size = 0x12000, scoped, tag = 'internal scratch']
  %s0 = inlined_call_operand.vmem [shape: f32[8,36], index: 0, kind: input, shape index: {}]
  %s1 = inlined_call_operand.vmem [shape: f32[8,1], index: 1, kind: input, shape index: {}]
  %s2 = inlined_call_operand.vmem [shape: f32[2,36,64], index: 2, kind: input, shape index: {}]
  %s3 = inlined_call_operand.hbm [shape: f32[2,8,64], index: 3, kind: output, shape index: {}]
  %s4 = sld [smem:[#allocation0]]
  $region45: #{tpu_custom_call.1} parent=0
    _
  %s6 = ssub.s32 1, %s4
  %s7 = scalar_select 0, %s6, %s4
  $region1: #{tpu_custom_call.1} parent=0
    #allocation2 [shape = 'u8[8192]{0}', space=vmem, size = 0x2000, scoped, tag = 'output window, operand 0']
    #allocation3 [shape = 's32[2]{0}', space=sflag, size = 0x8, scoped, tag = 'scoped memory for tpu_custom_call.1']
    %8 = vsyncpa [#allocation3], 0
    %s9 = scalar_lea.sflag [#allocation3], 1
    %10 = vsyncpa %s9, 0
    loop: start=0, step=1, limit=4
    $region2: #{tpu_custom_call.1} parent=1 // loop_pre_header
      _
    $region3: #{tpu_custom_call.1} parent=1 // loop_header
      %s12 = sphi 0, %s16
      %p13 = scmp.ge.s32.totalorder %s12, 4
      %s20 = sphi 0, %s20
      %s22 = sphi 0, %s20
      %s23 = sphi 0, %s22
      %s37 = sphi 0, %s23
      %s41 = sphi 0, %s41
      %s43 = sphi 0, %s41
      %s44 = sphi 0, %s43
      %s58 = sphi 0, %s44
      %s64 = sphi 0, %s66
      %s67 = sphi 0, %s64
      %s68 = sphi 0, %s67
      %s84 = sphi 0, %s68
      %s90 = sphi 0, %s92
      %s93 = sphi 0, %s90
      %s94 = sphi 0, %s93
      %s110 = sphi 0, %s94
    $region4: #{tpu_custom_call.1} parent=1 // loop_header_branch
      %15 = sbr.rel (%p13) target = $region8
    $region5: #{tpu_custom_call.1} parent=1 // loop_body
      %s17 = ssub.s32 %s12, 1
      %s18 = ssub.s32 %s12, 2
      %s19 = sadd.s32 %s12, 1
      %s21 = sadd.s32 %s20, 1
      %p24 = scmp.eq.s32.totalorder %s12, 1
      %p25 = scmp.ne.s32.totalorder %s20, %s22
      %p26 = scmp.eq.s32.totalorder %s12, 0
      %p27 = por %p25, %p26
      %p28 = scmp.ne.s32.totalorder %s20, %s22
      %p29 = scmp.eq.s32.totalorder %s17, 1
      %p30 = por %p28, %p29
      %p31 = scmp.ne.s32.totalorder %s22, %s23
      %p32 = scmp.eq.s32.totalorder %s17, 0
      %p33 = por %p31, %p32
      %p34 = scmp.ne.s32.totalorder %s22, %s23
      %p35 = scmp.eq.s32.totalorder %s18, 1
      %p36 = por %p34, %p35
      %p38 = scmp.ne.s32.totalorder %s23, %s37
      %p39 = scmp.eq.s32.totalorder %s18, 0
      %p40 = por %p38, %p39
      %s42 = sadd.s32 %s41, 1
      %p45 = scmp.eq.s32.totalorder %s12, 1
      %p46 = scmp.ne.s32.totalorder %s41, %s43
      %p47 = scmp.eq.s32.totalorder %s12, 0
      %p48 = por %p46, %p47
      %p49 = scmp.ne.s32.totalorder %s41, %s43
      %p50 = scmp.eq.s32.totalorder %s17, 1
      %p51 = por %p49, %p50
      %p52 = scmp.ne.s32.totalorder %s43, %s44
      %p53 = scmp.eq.s32.totalorder %s17, 0
      %p54 = por %p52, %p53
      %p55 = scmp.ne.s32.totalorder %s43, %s44
      %p56 = scmp.eq.s32.totalorder %s18, 1
      %p57 = por %p55, %p56
      %p59 = scmp.ne.s32.totalorder %s44, %s58
      %p60 = scmp.eq.s32.totalorder %s18, 0
      %p61 = por %p59, %p60
      %s62 = ssub.s32 %s12, %s19
      %p63 = scmp.eq.s32.totalorder %s62, 0
      %s65 = sadd.s32 %s64, 1
      %s66 = scalar_select %p63, %s64, %s65
      %p69 = pneg %p63
      %p70 = scmp.eq.s32.totalorder %s12, 1
      %p71 = por %p69, %p70
      %p72 = scmp.ne.s32.totalorder %s64, %s67
      %p73 = scmp.eq.s32.totalorder %s12, 0
      %p74 = por %p72, %p73
      %p75 = scmp.ne.s32.totalorder %s64, %s67
      %p76 = scmp.eq.s32.totalorder %s17, 1
      %p77 = por %p75, %p76
      %p78 = scmp.ne.s32.totalorder %s67, %s68
      %p79 = scmp.eq.s32.totalorder %s17, 0
      %p80 = por %p78, %p79
      %p81 = scmp.ne.s32.totalorder %s67, %s68
      %p82 = scmp.eq.s32.totalorder %s18, 1
      %p83 = por %p81, %p82
      %p85 = scmp.ne.s32.totalorder %s68, %s84
      %p86 = scmp.eq.s32.totalorder %s18, 0
      %p87 = por %p85, %p86
      %s88 = ssub.s32 %s12, %s19
      %p89 = scmp.eq.s32.totalorder %s88, 0
      %s91 = sadd.s32 %s90, 1
      %s92 = scalar_select %p89, %s90, %s91
      %p95 = pneg %p89
      %p96 = scmp.eq.s32.totalorder %s12, 1
      %p97 = por %p95, %p96
      %p98 = scmp.ne.s32.totalorder %s90, %s93
      %p99 = scmp.eq.s32.totalorder %s12, 0
      %p100 = por %p98, %p99
      %p101 = scmp.ne.s32.totalorder %s90, %s93
      %p102 = scmp.eq.s32.totalorder %s17, 1
      %p103 = por %p101, %p102
      %p104 = scmp.ne.s32.totalorder %s93, %s94
      %p105 = scmp.eq.s32.totalorder %s17, 0
      %p106 = por %p104, %p105
      %p107 = scmp.ne.s32.totalorder %s93, %s94
      %p108 = scmp.eq.s32.totalorder %s18, 1
      %p109 = por %p107, %p108
      %p111 = scmp.ne.s32.totalorder %s94, %s110
      %p112 = scmp.eq.s32.totalorder %s18, 0
      %p113 = por %p111, %p112
      %p114 = scmp.le.s32.totalorder 1, %s12
      %p115 = scmp.lt.s32.totalorder %s12, 3
      %p116 = pnand %p114, %p115
      %p117 = pneg %p116
      // Predicated region
      $region9: #{tpu_custom_call.1} parent=5 // pred_check
        _
      $region10: #{tpu_custom_call.1} parent=5 // pred_check_branch
        %119 = sbr.rel (%p116) target = $region12
      $region11: #{tpu_custom_call.1} parent=5 // pred_region
        %s120 = ssub.s32 %s12, 1
        // Predicated region
        $region13: #{tpu_custom_call.1} parent=11 // pred_check
          %p121 = pneg %p33
        $region14: #{tpu_custom_call.1} parent=11 // pred_check_branch
          %123 = sbr.rel (%p121) target = $region16
        $region15: #{tpu_custom_call.1} parent=11 // pred_region
          _
        $region16: #{tpu_custom_call.1} parent=11 // pred_fallthru
          _
        // Predicated region
        $region17: #{tpu_custom_call.1} parent=11 // pred_check
          %p124 = pneg %p54
        $region18: #{tpu_custom_call.1} parent=11 // pred_check_branch
          %126 = sbr.rel (%p124) target = $region20
        $region19: #{tpu_custom_call.1} parent=11 // pred_region
          _
        $region20: #{tpu_custom_call.1} parent=11 // pred_fallthru
          _
      $region12: #{tpu_custom_call.1} parent=5 // pred_fallthru
        _
      %p127 = scmp.lt.s32.totalorder %s12, 2
      // Predicated region
      $region21: #{tpu_custom_call.1} parent=5 // pred_check
        %p128 = pneg %p127
      $region22: #{tpu_custom_call.1} parent=5 // pred_check_branch
        %130 = sbr.rel (%p128) target = $region24
      $region23: #{tpu_custom_call.1} parent=5 // pred_region
        // Predicated region
        $region25: #{tpu_custom_call.1} parent=23 // pred_check
          %p131 = pneg %p74
        $region26: #{tpu_custom_call.1} parent=23 // pred_check_branch
          %133 = sbr.rel (%p131) target = $region28
        $region27: #{tpu_custom_call.1} parent=23 // pred_region
          %p134 = scmp.lt.s32.totalorder %s12, 1
          %s135 = scalar_select %p134, %s12, 1
          %s136 = smul.addr %s135, 5
          %s137 = smul.addr %s136, 8
          %s138 = scalar_lea.vmem %s2, %s137
        $region28: #{tpu_custom_call.1} parent=23 // pred_fallthru
          _
      $region24: #{tpu_custom_call.1} parent=5 // pred_fallthru
        _
      %p139 = scmp.le.s32.totalorder 1, %s12
      %p140 = scmp.lt.s32.totalorder %s12, 3
      %p141 = pnand %p139, %p140
      %p142 = pneg %p141
      // Predicated region
      $region29: #{tpu_custom_call.1} parent=5 // pred_check
        _
      $region30: #{tpu_custom_call.1} parent=5 // pred_check_branch
        %144 = sbr.rel (%p141) target = $region32
      $region31: #{tpu_custom_call.1} parent=5 // pred_region
        %s145 = ssub.s32 %s12, 1
        %p146 = pneg %p33
        %p147 = pneg %p30
        %p148 = pneg %p54
        %p149 = pneg %p51
        %p150 = scmp.lt.s32.totalorder %s17, 1
        %s151 = scalar_select %p150, %s17, 1
        %s152 = smul.addr %s151, 5
        %s153 = smul.addr %s152, 8
        %s154 = scalar_lea.vmem %s2, %s153
        %p155 = pneg %p80
        %p156 = pneg %p77
        %p157 = pneg %p106
        %p158 = pneg %p103
        %s159 = sand.u32 %s93, 1
        %s160 = scalar_lea.sflag [#allocation3], %s159
        %s161 = sand.u32 %s93, 1
        %s162 = smul.addr %s161, 8
        %s163 = scalar_lea.vmem [#allocation2], %s162
        %p164 = scmp.lt.s32.totalorder %s17, 1
        %s165 = scalar_select %p164, %s17, 1
        %s166 = smul.addr %s165, 5
        %s167 = smul.addr %s166, 8
        %s168 = scalar_lea.vmem %s2, %s167
        %v169 = vld [vmem:[%s0] sm:$0xff]
        %v170 = vld [vmem:[%s168] sm:$0xff]
        %v171 = vld [vmem:[%s168 + $0x8] sm:$0xff]
        %v172 = vld [vmem:[%s168 + $0x10] sm:$0xff]
        %v173 = vld [vmem:[%s168 + $0x18] sm:$0xff]
        %v174 = vld [vmem:[%s168 + $0x20] sm:$0xf]
        %v175 = vld [vmem:[%s1] sm:$0xff]
        %177 = vset.pattern.permute.xlu0 0
        %178 = vperm.xlu0 %177, %v175
        %v179 = vpop.permute.xlu0 %178
        %vm181 = vcmask 293888
        %v183 = vsel %vm181, %v169, 0
        %vm185 = vcmask 1043456
        %v187 = vsel %vm185, %v174, 0
        %189 = vmatprep.subr.mxu0 0.0
        %190 = vmatpush1.msra.mxu0 %v170
        %191 = vmatprep.subr.mxu0 0.0
        %192 = vmatpush1.msra.mxu0 %v171
        %193 = vmatprep.subr.mxu0 0.0
        %194 = vmatpush1.msra.mxu0 %v172
        %195 = vmatprep.subr.mxu0 0.0
        %196 = vmatpush1.msra.mxu0 %v173
        %197 = vmatprep.subr.mxu0 0.0
        %198 = vmatpush1.msra.mxu0 %v187
        %199 = vmatprep.subr.mxu0 0.0
        %200 = vmatpush1.msra.mxu0 0.0
        %201 = vmatprep.subr.mxu0 0.0
        %202 = vmatpush1.msra.mxu0 0.0
        %203 = vmatprep.subr.mxu0 0.0
        %204 = vmatpush1.msra.mxu0 0.0
        %205 = vmatprep.subr.mxu0 0.0
        %206 = vmatpush1.msra.mxu0 0.0
        %207 = vmatprep.subr.mxu0 0.0
        %208 = vmatpush1.msra.mxu0 0.0
        %209 = vmatprep.subr.mxu0 0.0
        %210 = vmatpush1.msra.mxu0 0.0
        %211 = vmatprep.subr.mxu0 0.0
        %212 = vmatpush1.msra.mxu0 0.0
        %213 = vmatprep.subr.mxu0 0.0
        %214 = vmatpush1.msra.mxu0 0.0
        %215 = vmatprep.subr.mxu0 0.0
        %216 = vmatpush1.msra.mxu0 0.0
        %217 = vmatprep.subr.mxu0 0.0
        %218 = vmatpush1.msra.mxu0 0.0
        %219 = vmatprep.subr.mxu0 0.0
        %220 = vmatpush1.msra.mxu0 0.0
        %221 = vmatprep.subr.mxu0 0.0
        %222 = vmatpush1.msra.mxu0 0.0
        %223 = vmatprep.subr.mxu0 0.0
        %224 = vmatpush1.msra.mxu0 0.0
        %225 = vmatprep.subr.mxu0 0.0
        %226 = vmatpush1.msra.mxu0 0.0
        %227 = vmatprep.subr.mxu0 0.0
        %228 = vmatpush1.msra.mxu0 0.0
        %229 = vmatprep.subr.mxu0 0.0
        %230 = vmatpush1.msra.mxu0 0.0
        %231 = vmatprep.subr.mxu0 0.0
        %232 = vmatpush1.msra.mxu0 0.0
        %233 = vmatprep.subr.mxu0 0.0
        %234 = vmatpush1.msra.mxu0 0.0
        %235 = vmatprep.subr.mxu0 0.0
        %236 = vmatpush1.msra.mxu0 0.0
        %237 = vmatprep.subr.mxu0 0.0
        %238 = vmatpush1.msra.mxu0 0.0
        %239 = vmatprep.subr.mxu0 0.0
        %240 = vmatpush1.msra.mxu0 0.0
        %241 = vmatprep.subr.mxu0 0.0
        %242 = vmatpush1.msra.mxu0 0.0
        %243 = vmatprep.subr.mxu0 0.0
        %244 = vmatpush1.msra.mxu0 0.0
        %245 = vmatprep.subr.mxu0 0.0
        %246 = vmatpush1.msra.mxu0 0.0
        %247 = vmatprep.subr.mxu0 0.0
        %248 = vmatpush1.msra.mxu0 0.0
        %249 = vmatprep.subr.mxu0 0.0
        %250 = vmatpush1.msra.mxu0 0.0
        %251 = vmatprep.subr.mxu0 0.0
        %252 = vmatpush1.msra.mxu0 0.0
        %253 = vmatprep.mubr.f32.mxu0 0.0
        %254 = vmatmul.mubr.f32.gmra.mrb[0].mxu0 %v183
        %v255 = vpop.f32.mrb[0].mxu0
        %v256 = vadd.f32 %v179, %v255
        %v257 = vpop.f32.mrb[0].mxu0
        %258 = vdwg.mxu0
        %vm259 = vcmask 523264
        %260 = vst.msk [vmem:[%s163] sm:$0xff] %vm259, %v256
        %s261 = sand.u32 %s93, 1
        %s262 = scalar_lea.sflag [#allocation3], %s261
        %s263 = sand.u32 %s93, 1
        %s264 = smul.addr %s263, 8
        %s265 = scalar_lea.vmem [#allocation2], %s264
        // Predicated region
        $region33: #{tpu_custom_call.1} parent=31 // pred_check
          %p266 = pneg %p103
        $region34: #{tpu_custom_call.1} parent=31 // pred_check_branch
          %268 = sbr.rel (%p266) target = $region36
        $region35: #{tpu_custom_call.1} parent=31 // pred_region
          %s270 = ssub.s32 128, 128
          %271 = vsyncadd %s262, %s270
          %s272 = smul.addr %s17, 128
          %s273 = scalar_lea.hbm %s3, %s272
          %s275 = sshll.u32 %s265, 4
          %s276 = int_to_ptr.vmem [resolvable:$true] %s275
          %278 = dma.vmem_to_hbm [thread:$0]  %s276, 128, %s273, %s262
        $region36: #{tpu_custom_call.1} parent=31 // pred_fallthru
          _
      $region32: #{tpu_custom_call.1} parent=5 // pred_fallthru
        _
      %p279 = scmp.le.s32.totalorder 2, %s12
      // Predicated region
      $region37: #{tpu_custom_call.1} parent=5 // pred_check
        %p280 = pneg %p279
      $region38: #{tpu_custom_call.1} parent=5 // pred_check_branch
        %282 = sbr.rel (%p280) target = $region40
      $region39: #{tpu_custom_call.1} parent=5 // pred_region
        %s283 = ssub.s32 %s12, 2
        // Predicated region
        $region41: #{tpu_custom_call.1} parent=39 // pred_check
          %p284 = pneg %p109
        $region42: #{tpu_custom_call.1} parent=39 // pred_check_branch
          %286 = sbr.rel (%p284) target = $region44
        $region43: #{tpu_custom_call.1} parent=39 // pred_region
          %s287 = sand.u32 %s94, 1
          %s288 = scalar_lea.sflag [#allocation3], %s287
          %s289 = sand.u32 %s94, 1
          %s290 = smul.addr %s289, 8
          %s291 = scalar_lea.vmem [#allocation2], %s290
          %292 = dma.done %s288, 128
        $region44: #{tpu_custom_call.1} parent=39 // pred_fallthru
          _
      $region40: #{tpu_custom_call.1} parent=5 // pred_fallthru
        _
    $region6: #{tpu_custom_call.1} parent=1 // loop_footer
      %s16 = sadd.s32 1, %s12
    $region7: #{tpu_custom_call.1} parent=1 // loop_footer_branch
      %11 = sbr.rel target = $region3
    $region8: #{tpu_custom_call.1} parent=1 // loop_exit
      _
    %293 = vsyncpa [#allocation3], 1
    %s294 = scalar_lea.sflag [#allocation3], 1
    %295 = vsyncpa %s294, 1

</llo_original>
